<compile_context>
chip_gen: v6e
topology: v6e:2x2x1
jax: 0.10.0
libtpu: 0.0.40
codegen_flags: <defaults>
</compile_context>

<pallas_src>
import functools

import jax
import jax.numpy as jnp
from jax.experimental import pallas as pl
from jax.experimental.pallas import tpu as pltpu


def _sslice(start, size, stride):
    """Static slice helper; only emit a strided ds when stride > 1."""
    return pl.ds(start, size) if stride == 1 else pl.ds(start, size, stride)


# --------------------------------------------------------------------------
# Kernel 1: non-overlapping windows (pad == 0, stride == ksize, dims divide).
# Input block: (ksize*ksize, Ho, TL) with taps pre-separated on the leading
# axis (contiguous loads) and (Wo, B) fused on lanes.  k^2 loads, 1 store,
# no scratch, no init.
# --------------------------------------------------------------------------
def _maxpool_kernel_nonoverlap(x_ref, o_ref, *, ntaps):
    acc = x_ref[0]
    for t in range(1, ntaps):
        acc = jnp.maximum(acc, x_ref[t])
    o_ref[...] = acc


# --------------------------------------------------------------------------
# Kernel 2: general case (padding and/or overlapping windows).
# Layout (H, W, TB): batch on lanes, W on sublanes, H untiled-major.
# Separable reduction: columns -> tmp (H, Wo, TB), then rows -> out.
# Interior (all taps valid) is a register reduce with a single store; the thin
# border columns/rows reduce only their valid taps (no minval init anywhere).
# --------------------------------------------------------------------------
def _maxpool_kernel_general(x_ref, o_ref, tmp_ref, *, ksize, stride, pad,
                            H, W, Ho, Wo):
    # ---- pass 1: reduce over window columns (kj) into tmp[h, jo, b] ----
    col_ranges = []
    for kj in range(ksize):
        jo0 = max(0, -((kj - pad) // stride))            # ceil((pad-kj)/stride)
        jo1 = min(Wo - 1, (W - 1 + pad - kj) // stride)
        col_ranges.append((jo0, jo1))
    ji0 = max(r[0] for r in col_ranges)                  # interior: all taps valid
    ji1 = min(r[1] for r in col_ranges)
    if ji1 >= ji0:
        n = ji1 - ji0 + 1
        acc = None
        for kj in range(ksize):
            w0 = ji0 * stride + kj - pad                 # >= 0 by construction
            tap = x_ref[:, _sslice(w0, n, stride), :]
            acc = tap if acc is None else jnp.maximum(acc, tap)
        tmp_ref[:, pl.ds(ji0, n), :] = acc
    border_cols = [jo for jo in range(Wo)
                   if not (ji1 >= ji0 and ji0 <= jo <= ji1)]
    for jo in border_cols:
        acc = None
        for kj in range(ksize):
            w = jo * stride + kj - pad
            if 0 <= w < W:
                tap = x_ref[:, pl.ds(w, 1), :]
                acc = tap if acc is None else jnp.maximum(acc, tap)
        tmp_ref[:, pl.ds(jo, 1), :] = acc                # >=1 valid tap (pad<k)

    # ---- pass 2: reduce over window rows (ki) into the output ----
    row_ranges = []
    for ki in range(ksize):
        io0 = max(0, -((ki - pad) // stride))
        io1 = min(Ho - 1, (H - 1 + pad - ki) // stride)
        row_ranges.append((io0, io1))
    ii0 = max(r[0] for r in row_ranges)
    ii1 = min(r[1] for r in row_ranges)
    if ii1 >= ii0:
        n = ii1 - ii0 + 1
        acc = None
        for ki in range(ksize):
            h0 = ii0 * stride + ki - pad
            tap = tmp_ref[_sslice(h0, n, stride), :, :]  # H is untiled-major: cheap
            acc = tap if acc is None else jnp.maximum(acc, tap)
        o_ref[pl.ds(ii0, n), :, :] = acc
    border_rows = [io for io in range(Ho)
                   if not (ii1 >= ii0 and ii0 <= io <= ii1)]
    for io in border_rows:
        acc = None
        for ki in range(ksize):
            h = io * stride + ki - pad
            if 0 <= h < H:
                tap = tmp_ref[pl.ds(h, 1), :, :]
                acc = tap if acc is None else jnp.maximum(acc, tap)
        o_ref[pl.ds(io, 1), :, :] = acc


# --------------------------------------------------------------------------
# Sizing helpers
# --------------------------------------------------------------------------
def _vmem_budget_bytes():
    """(per-step VMEM footprint budget, scoped vmem limit) per TPU generation."""
    try:
        cap = int(pltpu.get_tpu_info().vmem_capacity_bytes)
    except Exception:
        cap = 128 * 1024 * 1024          # v5e/v6e default if query unavailable
    return cap // 6, cap // 2


def _pick_lane_tile(total_lanes, bytes_per_lane_block, budget_bytes,
                    min_steps=4, target_step_bytes=4 << 20):
    """Pick the lane tile (multiple of 128, or the full axis if < 128).

    Targets >= min_steps grid steps (input/output DMA pipelining and balanced
    work across v7x megacore) while keeping each step's VMEM footprint under
    the budget and above a ~few-MiB floor so the ~0.35us/step grid overhead
    stays amortized.
    """
    if total_lanes <= 128:
        return int(total_lanes), 1
    lane_blocks = int(pl.cdiv(total_lanes, 128))
    cap = max(1, int(budget_bytes // bytes_per_lane_block))
    tb = min(lane_blocks, cap)
    if lane_blocks >= min_steps:
        tb = min(tb, max(1, lane_blocks // min_steps))
    floor = -(-target_step_bytes // bytes_per_lane_block)
    tb = int(max(1, max(tb, min(floor, cap, lane_blocks))))
    return tb * 128, int(pl.cdiv(lane_blocks, tb))


# --------------------------------------------------------------------------
# Wrapper
# --------------------------------------------------------------------------
def max_pool_spatial_2d(x, ksize, stride=None, pad=0):
    """Equivalent of plane_group_spatial_max_pooling for x of shape (N,C,G,H,W)."""
    if stride is None:
        stride = ksize
    assert 2 * pad <= ksize, "padding must be at most half the kernel size"
    N, C, G, H, W = x.shape
    Ho = (H + 2 * pad - ksize) // stride + 1
    Wo = (W + 2 * pad - ksize) // stride + 1
    B = N * C * G
    itemsize = jnp.dtype(x.dtype).itemsize
    budget, vmem_limit = _vmem_budget_bytes()

    nonoverlap = (pad == 0 and stride == ksize
                  and H % ksize == 0 and W % ksize == 0)

    if nonoverlap:
        # Fused single-pass kernel: taps contiguous on a leading axis,
        # (Wo, B) fused on the lane axis (handles small B without lane waste).
        k = ksize
        ntaps = k * k
        L = Wo * B
        xt = (x.reshape(B, Ho, k, Wo, k)
               .transpose(2, 4, 1, 3, 0)          # (ki, kj, Ho, Wo, B)
               .reshape(ntaps, Ho, L))            # one relayout copy in, one out
        # per-128-lane-block bytes: double-buffered in + out, plus ~2 register
        # intermediates the compiler may spill to VMEM.
        per_block = (2 * ntaps * Ho + 2 * Ho + 2 * Ho) * 128 * itemsize
        TL, steps = _pick_lane_tile(L, per_block, budget)
        kernel = functools.partial(_maxpool_kernel_nonoverlap, ntaps=ntaps)
        out = pl.pallas_call(
            kernel,
            out_shape=jax.ShapeDtypeStruct((Ho, L), x.dtype),
            grid=(steps,),
            in_specs=[pl.BlockSpec((ntaps, Ho, TL), lambda i: (0, 0, i))],
            out_specs=pl.BlockSpec((Ho, TL), lambda i: (0, i)),
            compiler_params=pltpu.CompilerParams(
                dimension_semantics=("parallel",),
                vmem_limit_bytes=int(vmem_limit)),
        )(xt)
        out = out.reshape(Ho, Wo, B).transpose(2, 0, 1)      # (B, Ho, Wo)
    else:
        # General path: lane-dense (H, W, B) layout; ragged last lane block is
        # masked by Pallas (no explicit jnp.pad HBM pass).
        # TODO(synk): B < 128 under-fills lanes here; only the non-overlapping
        # path can fuse Wo onto lanes.  Very large H*W with tiny B would also
        # need an H grid axis with a (ksize-1) halo.
        xt = jnp.moveaxis(x.reshape(B, H, W), 0, -1)          # (H, W, B)
        per_block = (2 * H * W + 2 * Ho * Wo + 3 * H * Wo) * 128 * itemsize
        TB, steps = _pick_lane_tile(B, per_block, budget)
        kernel = functools.partial(_maxpool_kernel_general, ksize=ksize,
                                   stride=stride, pad=pad, H=H, W=W,
                                   Ho=Ho, Wo=Wo)
        out = pl.pallas_call(
            kernel,
            out_shape=jax.ShapeDtypeStruct((Ho, Wo, B), x.dtype),
            grid=(steps,),
            in_specs=[pl.BlockSpec((H, W, TB), lambda i: (0, 0, i))],
            out_specs=pl.BlockSpec((Ho, Wo, TB), lambda i: (0, 0, i)),
            scratch_shapes=[pltpu.VMEM((H, Wo, TB), x.dtype)],
            compiler_params=pltpu.CompilerParams(
                dimension_semantics=("parallel",),
                vmem_limit_bytes=int(vmem_limit)),
        )(xt)
        out = jnp.moveaxis(out, -1, 0)                        # (B, Ho, Wo)

    return out.reshape(N, C, G, Ho, Wo)


def _reference(x, ksize, stride=None, pad=0):
    """Pure-JAX reference (matches F.max_pool2d on the flattened view)."""
    if stride is None:
        stride = ksize
    return jax.lax.reduce_window(
        x, -jnp.inf, jax.lax.max,
        window_dimensions=(1, 1, 1, ksize, ksize),
        window_strides=(1, 1, 1, stride, stride),
        padding=[(0, 0), (0, 0), (0, 0), (pad, pad), (pad, pad)],
    )


if __name__ == "__main__":
    key = jax.random.PRNGKey(0)
    # (N, C, G, H, W): batch=2, channels=4, group size=4, spatial=16
    x = jax.random.normal(key, (2, 4, 4, 16, 16), dtype=jnp.float32)

    # Default module config: ksize=2, stride=None (-> 2), pad=0  (fused path)
    y = max_pool_spatial_2d(x, ksize=2, stride=None, pad=0)
    y = jax.block_until_ready(y)
    y_ref = _reference(x, ksize=2, stride=None, pad=0)
    assert y.shape == (2, 4, 4, 8, 8), y.shape
    assert jnp.allclose(y, y_ref), "mismatch vs reference (ksize=2)"

    # Padding + overlapping stride: ksize=3, stride=2, pad=1  (general path)
    y2 = max_pool_spatial_2d(x, ksize=3, stride=2, pad=1)
    y2 = jax.block_until_ready(y2)
    y2_ref = _reference(x, ksize=3, stride=2, pad=1)
    assert y2.shape == y2_ref.shape, (y2.shape, y2_ref.shape)
    assert jnp.allclose(y2, y2_ref), "mismatch vs reference (ksize=3,pad=1)"

    print("KERNEL_OK")
</pallas_src>

<mosaic_0001>
module attributes {stable_mosaic.version = 11 : i64} {
  func.func @_maxpool_kernel_nonoverlap(%arg0: i32, %arg1: memref<4x8x256xf32, #tpu.memory_space<vmem>>, %arg2: memref<8x256xf32, #tpu.memory_space<vmem>>) attributes {dimension_semantics = [#tpu.dimension_semantics<parallel>], iteration_bounds = array<i64: 1>, scalar_prefetch = 0 : i64, scratch_operands = 0 : i64, tpu.core_type = #tpu.core_type<tc>, window_params = [{transform_indices = @transform_0, window_bounds = array<i64: 4, 8, 256>}, {transform_indices = @transform_1, window_bounds = array<i64: 8, 256>}]} {
    %c0 = arith.constant 0 : index
    %c0_0 = arith.constant 0 : index
    %c0_1 = arith.constant 0 : index
    %0 = vector.load %arg1[%c0, %c0_0, %c0_1] : memref<4x8x256xf32, #tpu.memory_space<vmem>>, vector<1x8x256xf32>
    %1 = vector.shape_cast %0 : vector<1x8x256xf32> to vector<8x256xf32>
    %c1 = arith.constant 1 : index
    %c0_2 = arith.constant 0 : index
    %c0_3 = arith.constant 0 : index
    %2 = vector.load %arg1[%c1, %c0_2, %c0_3] : memref<4x8x256xf32, #tpu.memory_space<vmem>>, vector<1x8x256xf32>
    %3 = vector.shape_cast %2 : vector<1x8x256xf32> to vector<8x256xf32>
    %4 = arith.maximumf %1, %3 : vector<8x256xf32>
    %c2 = arith.constant 2 : index
    %c0_4 = arith.constant 0 : index
    %c0_5 = arith.constant 0 : index
    %5 = vector.load %arg1[%c2, %c0_4, %c0_5] : memref<4x8x256xf32, #tpu.memory_space<vmem>>, vector<1x8x256xf32>
    %6 = vector.shape_cast %5 : vector<1x8x256xf32> to vector<8x256xf32>
    %7 = arith.maximumf %4, %6 : vector<8x256xf32>
    %c3 = arith.constant 3 : index
    %c0_6 = arith.constant 0 : index
    %c0_7 = arith.constant 0 : index
    %8 = vector.load %arg1[%c3, %c0_6, %c0_7] : memref<4x8x256xf32, #tpu.memory_space<vmem>>, vector<1x8x256xf32>
    %9 = vector.shape_cast %8 : vector<1x8x256xf32> to vector<8x256xf32>
    %10 = arith.maximumf %7, %9 : vector<8x256xf32>
    %c0_8 = arith.constant 0 : index
    %c0_9 = arith.constant 0 : index
    %11 = vector.load %arg2[%c0_8, %c0_9] : memref<8x256xf32, #tpu.memory_space<vmem>>, vector<8x256xf32>
    tpu.vector_store %arg2[%c0_8, %c0_9], %10 {strides = array<i32>} : memref<8x256xf32, #tpu.memory_space<vmem>>, vector<8x256xf32>,
    return
  }
  func.func @transform_0(%arg0: i32) -> (i32, i32, i32) {
    %c0_i32 = arith.constant 0 : i32
    %c0_i32_0 = arith.constant 0 : i32
    %c0_i32_1 = arith.constant 0 : i32
    return %c0_i32, %c0_i32_0, %arg0 : i32, i32, i32
  }
  func.func @transform_1(%arg0: i32) -> (i32, i32) {
    %c0_i32 = arith.constant 0 : i32
    %c0_i32_0 = arith.constant 0 : i32
    return %c0_i32, %arg0 : i32, i32
  }
}

</mosaic_0001>

<llo_original>
// kernel: tpu_custom_call.1
$region0: #{tpu_custom_call.1}
  #allocation0 [shape = 'u32[]', space=smem, size = 0x4, offset = 0x4, fixed_abs, tag = 'smem constant byte address 0x4 - core index']
  #allocation1 [shape = 'u32[144,128]{1,0:T(1,128)}', space=vmem, size = 0x12000, scoped, tag = 'internal scratch']
  %s0 = inlined_call_operand.hbm [shape: f32[4,8,256], index: 0, kind: input, shape index: {}]
  %s1 = inlined_call_operand.hbm [shape: f32[8,256], index: 1, kind: output, shape index: {}]
  %s2 = sld [smem:[#allocation0]]
  $region18: #{tpu_custom_call.1} parent=0
    _
  %s4 = ssub.s32 1, %s2
  %s5 = scalar_select 0, %s4, %s2
  $region1: #{tpu_custom_call.1} parent=0
    #allocation2 [shape = 'u8[32768]{0}', space=vmem, size = 0x8000, scoped, tag = 'input window, operand 0, single buffered']
    #allocation3 [shape = 's32[1]{0}', space=sflag, size = 0x4, scoped, tag = 'scoped memory for tpu_custom_call.1']
    #allocation4 [shape = 's32[1]{0}', space=sflag, size = 0x4, scoped, tag = 'scoped memory for tpu_custom_call.1']
    #allocation5 [shape = 'u8[8192]{0}', space=vmem, size = 0x2000, scoped, tag = 'output window, operand 0, single buffered']
    %6 = vsyncpa [#allocation3], 0
    %7 = vsyncpa [#allocation4], 0
    // Predicated region
    $region2: #{tpu_custom_call.1} parent=1 // pred_check
      _
    $region3: #{tpu_custom_call.1} parent=1 // pred_check_branch
      %9 = sbr.rel (0) target = $region5
    $region4: #{tpu_custom_call.1} parent=1 // pred_region
      %s11 = ssub.s32 1024, 1024
      %12 = vsyncadd [#allocation3], %s11
      %s13 = sshll.u32 [#allocation2], 4
      %s14 = int_to_ptr.vmem [resolvable:$true] %s13
      %19 = dma.hbm_to_vmem [thread:$0]  %s0, 1024, %s14, [#allocation3], 256, 256, 16
    $region5: #{tpu_custom_call.1} parent=1 // pred_fallthru
      _
    // Predicated region
    $region6: #{tpu_custom_call.1} parent=1 // pred_check
      _
    $region7: #{tpu_custom_call.1} parent=1 // pred_check_branch
      %21 = sbr.rel (0) target = $region9
    $region8: #{tpu_custom_call.1} parent=1 // pred_region
      %22 = dma.done [#allocation3], 1024
    $region9: #{tpu_custom_call.1} parent=1 // pred_fallthru
      _
    %v23 = vld [vmem:[#allocation2] sm:$0xff]
    %v24 = vld [vmem:[#allocation2 + $0x8] sm:$0xff]
    %s25 = scalar_lea.vmem [#allocation2], 16
    %v26 = vld [vmem:[%s25] sm:$0xff]
    %v27 = vld [vmem:[%s25 + $0x8] sm:$0xff]
    %v28 = vmax.f32 %v23, %v26
    %v29 = vmax.f32 %v24, %v27
    %s30 = scalar_lea.vmem [#allocation2], 32
    %v31 = vld [vmem:[%s30] sm:$0xff]
    %v32 = vld [vmem:[%s30 + $0x8] sm:$0xff]
    %v33 = vmax.f32 %v28, %v31
    %v34 = vmax.f32 %v29, %v32
    %s35 = scalar_lea.vmem [#allocation2], 48
    %v36 = vld [vmem:[%s35] sm:$0xff]
    %v37 = vld [vmem:[%s35 + $0x8] sm:$0xff]
    %v38 = vmax.f32 %v33, %v36
    %v39 = vmax.f32 %v34, %v37
    %40 = vst [vmem:[#allocation5] sm:$0xff] %v38
    %41 = vst [vmem:[#allocation5 + $0x8] sm:$0xff] %v39
    // Predicated region
    $region10: #{tpu_custom_call.1} parent=1 // pred_check
      _
    $region11: #{tpu_custom_call.1} parent=1 // pred_check_branch
      %43 = sbr.rel (0) target = $region13
    $region12: #{tpu_custom_call.1} parent=1 // pred_region
      %s45 = ssub.s32 256, 256
      %46 = vsyncadd [#allocation4], %s45
      %s48 = sshll.u32 [#allocation5], 4
      %s49 = int_to_ptr.vmem [resolvable:$true] %s48
      %51 = dma.vmem_to_hbm [thread:$0]  %s49, 256, %s1, [#allocation4]
    $region13: #{tpu_custom_call.1} parent=1 // pred_fallthru
      _
    // Predicated region
    $region14: #{tpu_custom_call.1} parent=1 // pred_check
      _
    $region15: #{tpu_custom_call.1} parent=1 // pred_check_branch
      %53 = sbr.rel (0) target = $region17
    $region16: #{tpu_custom_call.1} parent=1 // pred_region
      %54 = dma.done [#allocation4], 256
    $region17: #{tpu_custom_call.1} parent=1 // pred_fallthru
      _
    %55 = vsyncpa [#allocation3], 1
    %56 = vsyncpa [#allocation4], 1

</llo_original>
